<compile_context>
chip_gen: v6e
topology: v6e:2x2x1
jax: 0.10.0
libtpu: 0.0.40
codegen_flags: <defaults>
</compile_context>

<pallas_src>
import functools
import math

import numpy as np
import jax
import jax.numpy as jnp
from jax import lax
from jax.experimental import pallas as pl
from jax.experimental.pallas import tpu as pltpu


def _round_up(x: int, m: int) -> int:
    return (x + m - 1) // m * m


def _cdiv(a: int, b: int) -> int:
    return (a + b - 1) // b


# --------------------------------------------------------------------------- #
# Hardware-aware configuration
# --------------------------------------------------------------------------- #
def _device_kind() -> str:
    try:
        return jax.devices()[0].device_kind.lower()
    except Exception:
        return ""


def _select_mxu_dtypes(kind: str, mxu_dtype: str):
    """Returns (storage dtype for x_q / ternary weights, matmul accumulator dtype)."""
    if mxu_dtype == "int8":
        return jnp.int8, jnp.int32
    if mxu_dtype == "bf16":
        return jnp.bfloat16, jnp.float32
    # auto: true int8 MXU path on v5e/v6e (~2x bf16 throughput, half the weight bytes).
    # v7x has an fp8-only MXU -> bf16 (ternary weights & integer levels are exact in bf16).
    if ("7" not in kind) and (("v5" in kind) or ("v6" in kind)):
        return jnp.int8, jnp.int32
    return jnp.bfloat16, jnp.float32


def _vmem_cap_bytes(kind: str) -> int:
    if ("v5" in kind) or ("v6" in kind):
        return 96 * 1024 * 1024          # 128 MiB physical VMEM on v5e / v6e
    return 40 * 1024 * 1024              # v7x: 64 MiB physical per TC; unknown: conservative


def _matmul_footprint(tm, tn, dim_in, xq_b, w_b, out_b):
    wgt = 2 * dim_in * (2 * tn) * w_b    # double-buffered resident weight block
    act = 2 * tm * dim_in * xq_b         # streamed quantized activations
    out = 2 * tm * tn * out_b
    tmp = 4 * tm * (2 * tn) * 4          # accumulator + f32 epilogue temporaries
    return wgt + act + out + tmp + 2 * tm * 4


def _quant_footprint(tm, dim_in, xin_b, xq_b):
    return 2 * tm * dim_in * (xin_b + xq_b) + 4 * tm * dim_in * 4 + 2 * tm * 4


def _choose_tiles(M, dim_in, n_half, xin_b, xq_b, w_b, out_b, budget, two_core):
    # Feature tile: largest lane-aligned divisor of n_half (or the full half-width).
    tn_cands = [t for t in (512, 384, 256, 128) if t <= n_half and n_half % t == 0]
    tn_cands = tn_cands or [n_half]
    sub = 32                              # sublane multiple covering int8/bf16/f32 packing
    tm_cap = min(512, _round_up(M, sub))
    tm_cands = [t for t in (512, 384, 256, 128, 64, 32) if t <= tm_cap] or [tm_cap]

    tm, tn = tm_cands[-1], tn_cands[-1]
    for tn_c in tn_cands:
        fitting = [
            t for t in tm_cands
            if max(_matmul_footprint(t, tn_c, dim_in, xq_b, w_b, out_b),
                   _quant_footprint(t, dim_in, xin_b, xq_b)) <= budget
        ]
        if fitting:
            # prefer the largest row tile whose padding waste is modest
            good = [t for t in fitting if (_round_up(M, t) - M) <= max(M // 4, sub)]
            tm = max(good) if good else min(fitting, key=lambda t: (_round_up(M, t), -t))
            tn = tn_c
            break
    # TODO(synk): for dim_in too large for even the smallest tile, add a trailing
    #             "arbitrary" K grid axis with an f32 VMEM accumulator (needs a
    #             norm/abs-max pre-pass over the full row).

    # 2-TensorCore chips (v7x): make sure decode-sized shapes expose >= 2 grid blocks.
    if two_core and _cdiv(M, tm) == 1 and n_half // tn == 1:
        for t in (256, 128):
            if t < n_half and n_half % t == 0:
                tn = t
                break
    return tm, tn


# --------------------------------------------------------------------------- #
# Pass 1: SimpleRMSNorm + activation_quant (computed ONCE per token row)
# --------------------------------------------------------------------------- #
def _rmsnorm_quant_kernel(x_ref, xq_ref, s_ref, *, dim_in: int):
    x = x_ref[...].astype(jnp.float32)
    # F.normalize(x, dim=-1, eps=1e-12) * sqrt(dim_in): one EUP rsqrt + a VPU multiply.
    sumsq = jnp.sum(x * x, axis=-1, keepdims=True)
    x_n = x * (jnp.float32(math.sqrt(dim_in)) * lax.rsqrt(jnp.maximum(sumsq, 1e-24)))
    # activation_quant: emit raw integer levels; the 1/scale factor goes out per-row and
    # is applied to the matmul accumulator (exact, and enables the int8 MXU path).
    amax = jnp.maximum(jnp.max(jnp.abs(x_n), axis=-1, keepdims=True), 1e-5)
    q = jnp.clip(jnp.round(x_n * (127.0 * pl.reciprocal(amax, approx=False))),
                 -128.0, 127.0)
    xq_ref[...] = q.astype(xq_ref.dtype)
    s_ref[...] = amax * jnp.float32(1.0 / 127.0)


# --------------------------------------------------------------------------- #
# Pass 2: weight-resident ternary matmul (both GLU halves in ONE dot) + SiLU gate
# --------------------------------------------------------------------------- #
def _bit_glu_matmul_kernel(xq_ref, s_ref, w_ref, o_ref, *, tn: int, acc_dtype):
    # xq_ref: (tm, dim_in)   integer activation levels (int8 or bf16)
    # s_ref : (tm, 1) f32    = activation_inv_scale * weight_scale
    # w_ref : (dim_in, 2*tn) ternary weights; [:, :tn] -> "a" half, [:, tn:] -> gate half
    y = jnp.dot(xq_ref[...], w_ref[...], preferred_element_type=acc_dtype)
    y = y.astype(jnp.float32) * s_ref[...]            # scales applied post-matmul (exact)
    a = y[:, :tn]
    gate = y[:, tn:]
    sig = pl.reciprocal(1.0 + jnp.exp(-gate), approx=False)   # exact sigmoid
    o_ref[...] = (a * gate * sig).astype(o_ref.dtype)


# --------------------------------------------------------------------------- #
# Weight quantization + GLU packing (static w.r.t. the model weights)
# --------------------------------------------------------------------------- #
def quantize_pack_weights(weight, *, dim_out: int, tn: int, w_dtype):
    """weight_quant + pack so that packed block j of width 2*tn is [a_cols_j | gate_cols_j]."""
    n_half = 2 * dim_out
    w = weight.astype(jnp.float32)                       # (4*dim_out, dim_in)
    w_scale = jnp.mean(jnp.abs(w))
    ternary = jnp.sign(w - jnp.mean(w))                  # {-1, 0, +1}
    wt = ternary.T                                       # (dim_in, 4*dim_out): F.linear = x @ w.T
    dim_in = wt.shape[0]
    nj = n_half // tn
    w_packed = jnp.concatenate(
        [wt[:, :n_half].reshape(dim_in, nj, tn),
         wt[:, n_half:].reshape(dim_in, nj, tn)],
        axis=2,
    ).reshape(dim_in, 2 * n_half).astype(w_dtype)
    return w_packed, w_scale


def bit_glu_forward(x, weight, *, dim_in: int, dim_out: int,
                    out_dtype=None, mxu_dtype: str = "auto"):
    """x: (B, N, dim_in); weight: (4*dim_out, dim_in) as laid out by nn.Linear."""
    B, N, D = x.shape
    assert D == dim_in and weight.shape == (4 * dim_out, dim_in)
    n_half = 2 * dim_out
    out_dtype = x.dtype if out_dtype is None else out_dtype

    kind = _device_kind()
    xq_dtype, acc_dtype = _select_mxu_dtypes(kind, mxu_dtype)
    xq_b = np.dtype(xq_dtype).itemsize
    cap = _vmem_cap_bytes(kind)

    M = B * N
    tm, tn = _choose_tiles(
        M, dim_in, n_half,
        xin_b=np.dtype(x.dtype).itemsize, xq_b=xq_b, w_b=xq_b,
        out_b=np.dtype(out_dtype).itemsize,
        budget=int(0.85 * cap), two_core=("7" in kind))
    Mp = _round_up(M, tm)

    # ---- weight_quant + GLU packing (global reductions stay in XLA glue) ----
    # TODO(synk): cache (w_packed, w_scale) across calls for inference; they are static
    #             given the weights and tn.
    w_packed, w_scale = quantize_pack_weights(weight, dim_out=dim_out, tn=tn,
                                              w_dtype=xq_dtype)

    x2d = x.reshape(M, dim_in)
    if Mp != M:
        x2d = jnp.pad(x2d, ((0, Mp - M), (0, 0)))        # zero rows quantize to zero

    # ---- pass 1: RMSNorm + per-token quant, once per row ----
    xq, inv_scale = pl.pallas_call(
        functools.partial(_rmsnorm_quant_kernel, dim_in=dim_in),
        out_shape=(jax.ShapeDtypeStruct((Mp, dim_in), xq_dtype),
                   jax.ShapeDtypeStruct((Mp, 1), jnp.float32)),
        grid_spec=pltpu.PrefetchScalarGridSpec(
            num_scalar_prefetch=0,
            grid=(Mp // tm,),
            in_specs=[pl.BlockSpec((tm, dim_in), lambda i: (i, 0))],
            out_specs=[pl.BlockSpec((tm, dim_in), lambda i: (i, 0)),
                       pl.BlockSpec((tm, 1), lambda i: (i, 0))],
        ),
        compiler_params=pltpu.CompilerParams(
            dimension_semantics=("parallel",),
            vmem_limit_bytes=cap),
    )(x2d)

    # fold the scalar weight scale into the per-row activation scale (tiny fused XLA op)
    row_scale = inv_scale * w_scale

    # ---- pass 2: weight-resident ternary matmul + GLU epilogue ----
    # Grid: feature tiles OUTER, row tiles INNER -> weight block index is constant along
    # the inner axis, so each weight block is DMA'd from HBM exactly once.
    # TODO(synk): single-buffer the resident weight BlockSpec / Buffered(3) the streamed
    #             activations once pipeline_mode behavior is validated on all generations.
    out = pl.pallas_call(
        functools.partial(_bit_glu_matmul_kernel, tn=tn, acc_dtype=acc_dtype),
        out_shape=jax.ShapeDtypeStruct((Mp, n_half), out_dtype),
        grid_spec=pltpu.PrefetchScalarGridSpec(
            num_scalar_prefetch=0,
            grid=(n_half // tn, Mp // tm),
            in_specs=[
                pl.BlockSpec((tm, dim_in), lambda j, i: (i, 0)),      # streamed x_q
                pl.BlockSpec((tm, 1), lambda j, i: (i, 0)),           # per-row scale
                pl.BlockSpec((dim_in, 2 * tn), lambda j, i: (0, j)),  # resident weights
            ],
            out_specs=pl.BlockSpec((tm, tn), lambda j, i: (i, j)),
        ),
        compiler_params=pltpu.CompilerParams(
            dimension_semantics=("parallel", "parallel"),
            vmem_limit_bytes=cap),
    )(xq, row_scale, w_packed)

    return out[:M].reshape(B, N, n_half)


# --------------------------------------------------------------------------- #
# Pure-JAX reference (matches the PyTorch forward) for a correctness check
# --------------------------------------------------------------------------- #
def _reference_glu(x, weight, dim_in, dim_out):
    n_half = 2 * dim_out
    xf = x.astype(jnp.float32)
    l2 = jnp.sqrt(jnp.sum(xf * xf, axis=-1, keepdims=True))
    x_n = xf / jnp.maximum(l2, 1e-12) * math.sqrt(dim_in)
    amax = jnp.maximum(jnp.max(jnp.abs(x_n), axis=-1, keepdims=True), 1e-5)
    scale = 127.0 / amax
    x_q = jnp.clip(jnp.round(x_n * scale), -128, 127) / scale
    w = weight.astype(jnp.float32)
    w_q = jnp.sign(w - jnp.mean(w)) * jnp.mean(jnp.abs(w))
    y = x_q @ w_q.T
    a, gate = y[..., :n_half], y[..., n_half:]
    return a * (gate * jax.nn.sigmoid(gate))


if __name__ == "__main__":
    B, N = 2, 8
    dim_in, dim_out = 32, 32

    key = jax.random.PRNGKey(0)
    kx, kw = jax.random.split(key)
    x = jax.random.normal(kx, (B, N, dim_in), dtype=jnp.float32)
    # nn.Linear default init: U(-1/sqrt(in_features), 1/sqrt(in_features))
    bound = 1.0 / math.sqrt(dim_in)
    weight = jax.random.uniform(
        kw, (4 * dim_out, dim_in), minval=-bound, maxval=bound, dtype=jnp.float32)

    fwd = jax.jit(functools.partial(bit_glu_forward, dim_in=dim_in, dim_out=dim_out))
    try:
        y = fwd(x, weight)
        jax.block_until_ready(y)
    except Exception:
        # If this chip/toolchain rejects the integer MXU path, fall back to exact bf16.
        fwd = jax.jit(functools.partial(bit_glu_forward, dim_in=dim_in,
                                        dim_out=dim_out, mxu_dtype="bf16"))
        y = fwd(x, weight)
        jax.block_until_ready(y)

    assert y.shape == (B, N, 2 * dim_out)
    assert bool(jnp.all(jnp.isfinite(y)))
    ref = _reference_glu(x, weight, dim_in, dim_out)
    assert bool(jnp.allclose(y.astype(jnp.float32), ref, rtol=2e-2, atol=2e-2))
    print("KERNEL_OK")
</pallas_src>

<mosaic_0001>
module attributes {stable_mosaic.version = 11 : i64} {
  func.func @_rmsnorm_quant_kernel(%arg0: i32, %arg1: memref<32x32xf32, #tpu.memory_space<vmem>>, %arg2: memref<32x32xbf16, #tpu.memory_space<vmem>>, %arg3: memref<32x1xf32, #tpu.memory_space<vmem>>) attributes {dimension_semantics = [#tpu.dimension_semantics<parallel>], iteration_bounds = array<i64: 1>, scalar_prefetch = 0 : i64, scratch_operands = 0 : i64, tpu.core_type = #tpu.core_type<tc>, window_params = [{transform_indices = @transform_0, window_bounds = array<i64: 32, 32>}, {transform_indices = @transform_1, window_bounds = array<i64: 32, 32>}, {transform_indices = @transform_2, window_bounds = array<i64: 32, 1>}]} {
    %c0 = arith.constant 0 : index
    %c0_0 = arith.constant 0 : index
    %0 = vector.load %arg1[%c0, %c0_0] : memref<32x32xf32, #tpu.memory_space<vmem>>, vector<32x32xf32>
    %1 = arith.mulf %0, %0 : vector<32x32xf32>
    %cst = arith.constant dense<0.000000e+00> : vector<32xf32>
    %2 = vector.multi_reduction <add>, %1, %cst [1] : vector<32x32xf32> to vector<32xf32>
    %3 = vector.shape_cast %2 : vector<32xf32> to vector<32x1xf32>
    %cst_1 = arith.constant 1.000000e-24 : f32
    %4 = vector.broadcast %cst_1 : f32 to vector<32x1xf32>
    %5 = arith.maximumf %3, %4 : vector<32x1xf32>
    %6 = math.rsqrt %5 : vector<32x1xf32>
    %cst_2 = arith.constant 5.65685415 : f32
    %7 = vector.broadcast %cst_2 : f32 to vector<32x1xf32>
    %8 = arith.mulf %7, %6 : vector<32x1xf32>
    %9 = vector.broadcast %8 : vector<32x1xf32> to vector<32x32xf32>
    %10 = arith.mulf %0, %9 : vector<32x32xf32>
    %11 = math.absf %10 : vector<32x32xf32>
    %cst_3 = arith.constant dense<0xFF800000> : vector<32xf32>
    %12 = vector.multi_reduction <maximumf>, %11, %cst_3 [1] : vector<32x32xf32> to vector<32xf32>
    %13 = vector.shape_cast %12 : vector<32xf32> to vector<32x1xf32>
    %cst_4 = arith.constant 9.99999974E-6 : f32
    %14 = vector.broadcast %cst_4 : f32 to vector<32x1xf32>
    %15 = arith.maximumf %13, %14 : vector<32x1xf32>
    %16 = tpu.reciprocal %15 : vector<32x1xf32> -> vector<32x1xf32>
    %cst_5 = arith.constant 1.270000e+02 : f32
    %17 = vector.broadcast %cst_5 : f32 to vector<32x1xf32>
    %18 = arith.mulf %17, %16 : vector<32x1xf32>
    %19 = vector.broadcast %18 : vector<32x1xf32> to vector<32x32xf32>
    %20 = arith.mulf %10, %19 : vector<32x32xf32>
    %21 = math.roundeven %20 : vector<32x32xf32>
    %cst_6 = arith.constant -1.280000e+02 : f32
    %cst_7 = arith.constant 1.270000e+02 : f32
    %22 = vector.broadcast %cst_6 : f32 to vector<32x32xf32>
    %23 = arith.maximumf %22, %21 : vector<32x32xf32>
    %24 = vector.broadcast %cst_7 : f32 to vector<32x32xf32>
    %25 = arith.minimumf %24, %23 : vector<32x32xf32>
    %26 = arith.truncf %25 : vector<32x32xf32> to vector<32x32xbf16>
    %c0_8 = arith.constant 0 : index
    %c0_9 = arith.constant 0 : index
    %27 = vector.load %arg2[%c0_8, %c0_9] : memref<32x32xbf16, #tpu.memory_space<vmem>>, vector<32x32xbf16>
    tpu.vector_store %arg2[%c0_8, %c0_9], %26 {strides = array<i32>} : memref<32x32xbf16, #tpu.memory_space<vmem>>, vector<32x32xbf16>,
    %cst_10 = arith.constant 0.00787401571 : f32
    %28 = vector.broadcast %cst_10 : f32 to vector<32x1xf32>
    %29 = arith.mulf %15, %28 : vector<32x1xf32>
    %c0_11 = arith.constant 0 : index
    %c0_12 = arith.constant 0 : index
    %30 = vector.load %arg3[%c0_11, %c0_12] : memref<32x1xf32, #tpu.memory_space<vmem>>, vector<32x1xf32>
    tpu.vector_store %arg3[%c0_11, %c0_12], %29 {strides = array<i32>} : memref<32x1xf32, #tpu.memory_space<vmem>>, vector<32x1xf32>,
    return
  }
  func.func @transform_0(%arg0: i32) -> (i32, i32) {
    %c0_i32 = arith.constant 0 : i32
    %c0_i32_0 = arith.constant 0 : i32
    return %arg0, %c0_i32 : i32, i32
  }
  func.func @transform_1(%arg0: i32) -> (i32, i32) {
    %c0_i32 = arith.constant 0 : i32
    %c0_i32_0 = arith.constant 0 : i32
    return %arg0, %c0_i32 : i32, i32
  }
  func.func @transform_2(%arg0: i32) -> (i32, i32) {
    %c0_i32 = arith.constant 0 : i32
    %c0_i32_0 = arith.constant 0 : i32
    return %arg0, %c0_i32 : i32, i32
  }
}

module attributes {stable_mosaic.version = 11 : i64} {
  func.func @_bit_glu_matmul_kernel(%arg0: i32, %arg1: i32, %arg2: memref<32x32xbf16, #tpu.memory_space<vmem>>, %arg3: memref<32x1xf32, #tpu.memory_space<vmem>>, %arg4: memref<32x128xbf16, #tpu.memory_space<vmem>>, %arg5: memref<32x64xf32, #tpu.memory_space<vmem>>) attributes {dimension_semantics = [#tpu.dimension_semantics<parallel>, #tpu.dimension_semantics<parallel>], iteration_bounds = array<i64: 1, 1>, scalar_prefetch = 0 : i64, scratch_operands = 0 : i64, tpu.core_type = #tpu.core_type<tc>, window_params = [{transform_indices = @transform_0, window_bounds = array<i64: 32, 32>}, {transform_indices = @transform_1, window_bounds = array<i64: 32, 1>}, {transform_indices = @transform_2, window_bounds = array<i64: 32, 128>}, {transform_indices = @transform_3, window_bounds = array<i64: 32, 64>}]} {
    %c0 = arith.constant 0 : index
    %c0_0 = arith.constant 0 : index
    %0 = vector.load %arg2[%c0, %c0_0] : memref<32x32xbf16, #tpu.memory_space<vmem>>, vector<32x32xbf16>
    %c0_1 = arith.constant 0 : index
    %c0_2 = arith.constant 0 : index
    %1 = vector.load %arg4[%c0_1, %c0_2] : memref<32x128xbf16, #tpu.memory_space<vmem>>, vector<32x128xbf16>
    %cst = arith.constant dense<0.000000e+00> : vector<32x128xf32>
    %2 = tpu.matmul %0, %1, %cst {dimension_numbers = #tpu.dot_dimension_numbers<[1], [0], [0], [1], [0, 0, 1, 1], [], []>} : vector<32x32xbf16>, vector<32x128xbf16>, vector<32x128xf32> -> vector<32x128xf32>
    %c0_3 = arith.constant 0 : index
    %c0_4 = arith.constant 0 : index
    %3 = vector.load %arg3[%c0_3, %c0_4] : memref<32x1xf32, #tpu.memory_space<vmem>>, vector<32x1xf32>
    %4 = vector.broadcast %3 : vector<32x1xf32> to vector<32x128xf32>
    %5 = arith.mulf %2, %4 : vector<32x128xf32>
    %6 = vector.extract_strided_slice %5 {offsets = [0, 0], sizes = [32, 64], strides = [1, 1]} : vector<32x128xf32> to vector<32x64xf32>
    %7 = vector.extract_strided_slice %5 {offsets = [0, 64], sizes = [32, 64], strides = [1, 1]} : vector<32x128xf32> to vector<32x64xf32>
    %cst_5 = arith.constant 0.000000e+00 : f32
    %8 = vector.broadcast %cst_5 : f32 to vector<32x64xf32>
    %9 = arith.subf %8, %7 : vector<32x64xf32>
    %10 = math.exp %9 : vector<32x64xf32>
    %cst_6 = arith.constant 1.000000e+00 : f32
    %11 = vector.broadcast %cst_6 : f32 to vector<32x64xf32>
    %12 = arith.addf %11, %10 : vector<32x64xf32>
    %13 = tpu.reciprocal %12 : vector<32x64xf32> -> vector<32x64xf32>
    %14 = arith.mulf %6, %7 : vector<32x64xf32>
    %15 = arith.mulf %14, %13 : vector<32x64xf32>
    %c0_7 = arith.constant 0 : index
    %c0_8 = arith.constant 0 : index
    %16 = vector.load %arg5[%c0_7, %c0_8] : memref<32x64xf32, #tpu.memory_space<vmem>>, vector<32x64xf32>
    tpu.vector_store %arg5[%c0_7, %c0_8], %15 {strides = array<i32>} : memref<32x64xf32, #tpu.memory_space<vmem>>, vector<32x64xf32>,
    return
  }
  func.func @transform_0(%arg0: i32, %arg1: i32) -> (i32, i32) {
    %c0_i32 = arith.constant 0 : i32
    %c0_i32_0 = arith.constant 0 : i32
    return %arg1, %c0_i32 : i32, i32
  }
  func.func @transform_1(%arg0: i32, %arg1: i32) -> (i32, i32) {
    %c0_i32 = arith.constant 0 : i32
    %c0_i32_0 = arith.constant 0 : i32
    return %arg1, %c0_i32 : i32, i32
  }
  func.func @transform_2(%arg0: i32, %arg1: i32) -> (i32, i32) {
    %c0_i32 = arith.constant 0 : i32
    %c0_i32_0 = arith.constant 0 : i32
    return %c0_i32, %arg0 : i32, i32
  }
  func.func @transform_3(%arg0: i32, %arg1: i32) -> (i32, i32) {
    %c0_i32 = arith.constant 0 : i32
    return %arg1, %arg0 : i32, i32
  }
}

module attributes {stable_mosaic.version = 11 : i64} {
  func.func @_rmsnorm_quant_kernel(%arg0: i32, %arg1: memref<32x32xf32, #tpu.memory_space<vmem>>, %arg2: memref<32x32xbf16, #tpu.memory_space<vmem>>, %arg3: memref<32x1xf32, #tpu.memory_space<vmem>>) attributes {dimension_semantics = [#tpu.dimension_semantics<parallel>], iteration_bounds = array<i64: 1>, scalar_prefetch = 0 : i64, scratch_operands = 0 : i64, tpu.core_type = #tpu.core_type<tc>, window_params = [{transform_indices = @transform_0, window_bounds = array<i64: 32, 32>}, {transform_indices = @transform_1, window_bounds = array<i64: 32, 32>}, {transform_indices = @transform_2, window_bounds = array<i64: 32, 1>}]} {
    %c0 = arith.constant 0 : index
    %c0_0 = arith.constant 0 : index
    %0 = vector.load %arg1[%c0, %c0_0] : memref<32x32xf32, #tpu.memory_space<vmem>>, vector<32x32xf32>
    %1 = arith.mulf %0, %0 : vector<32x32xf32>
    %cst = arith.constant dense<0.000000e+00> : vector<32xf32>
    %2 = vector.multi_reduction <add>, %1, %cst [1] : vector<32x32xf32> to vector<32xf32>
    %3 = vector.shape_cast %2 : vector<32xf32> to vector<32x1xf32>
    %cst_1 = arith.constant 1.000000e-24 : f32
    %4 = vector.broadcast %cst_1 : f32 to vector<32x1xf32>
    %5 = arith.maximumf %3, %4 : vector<32x1xf32>
    %6 = math.rsqrt %5 : vector<32x1xf32>
    %cst_2 = arith.constant 5.65685415 : f32
    %7 = vector.broadcast %cst_2 : f32 to vector<32x1xf32>
    %8 = arith.mulf %7, %6 : vector<32x1xf32>
    %9 = vector.broadcast %8 : vector<32x1xf32> to vector<32x32xf32>
    %10 = arith.mulf %0, %9 : vector<32x32xf32>
    %11 = math.absf %10 : vector<32x32xf32>
    %cst_3 = arith.constant dense<0xFF800000> : vector<32xf32>
    %12 = vector.multi_reduction <maximumf>, %11, %cst_3 [1] : vector<32x32xf32> to vector<32xf32>
    %13 = vector.shape_cast %12 : vector<32xf32> to vector<32x1xf32>
    %cst_4 = arith.constant 9.99999974E-6 : f32
    %14 = vector.broadcast %cst_4 : f32 to vector<32x1xf32>
    %15 = arith.maximumf %13, %14 : vector<32x1xf32>
    %16 = tpu.reciprocal %15 : vector<32x1xf32> -> vector<32x1xf32>
    %cst_5 = arith.constant 1.270000e+02 : f32
    %17 = vector.broadcast %cst_5 : f32 to vector<32x1xf32>
    %18 = arith.mulf %17, %16 : vector<32x1xf32>
    %19 = vector.broadcast %18 : vector<32x1xf32> to vector<32x32xf32>
    %20 = arith.mulf %10, %19 : vector<32x32xf32>
    %21 = math.roundeven %20 : vector<32x32xf32>
    %cst_6 = arith.constant -1.280000e+02 : f32
    %cst_7 = arith.constant 1.270000e+02 : f32
    %22 = vector.broadcast %cst_6 : f32 to vector<32x32xf32>
    %23 = arith.maximumf %22, %21 : vector<32x32xf32>
    %24 = vector.broadcast %cst_7 : f32 to vector<32x32xf32>
    %25 = arith.minimumf %24, %23 : vector<32x32xf32>
    %26 = arith.truncf %25 : vector<32x32xf32> to vector<32x32xbf16>
    %c0_8 = arith.constant 0 : index
    %c0_9 = arith.constant 0 : index
    %27 = vector.load %arg2[%c0_8, %c0_9] : memref<32x32xbf16, #tpu.memory_space<vmem>>, vector<32x32xbf16>
    tpu.vector_store %arg2[%c0_8, %c0_9], %26 {strides = array<i32>} : memref<32x32xbf16, #tpu.memory_space<vmem>>, vector<32x32xbf16>,
    %cst_10 = arith.constant 0.00787401571 : f32
    %28 = vector.broadcast %cst_10 : f32 to vector<32x1xf32>
    %29 = arith.mulf %15, %28 : vector<32x1xf32>
    %c0_11 = arith.constant 0 : index
    %c0_12 = arith.constant 0 : index
    %30 = vector.load %arg3[%c0_11, %c0_12] : memref<32x1xf32, #tpu.memory_space<vmem>>, vector<32x1xf32>
    tpu.vector_store %arg3[%c0_11, %c0_12], %29 {strides = array<i32>} : memref<32x1xf32, #tpu.memory_space<vmem>>, vector<32x1xf32>,
    return
  }
  func.func @transform_0(%arg0: i32) -> (i32, i32) {
    %c0_i32 = arith.constant 0 : i32
    %c0_i32_0 = arith.constant 0 : i32
    return %arg0, %c0_i32 : i32, i32
  }
  func.func @transform_1(%arg0: i32) -> (i32, i32) {
    %c0_i32 = arith.constant 0 : i32
    %c0_i32_0 = arith.constant 0 : i32
    return %arg0, %c0_i32 : i32, i32
  }
  func.func @transform_2(%arg0: i32) -> (i32, i32) {
    %c0_i32 = arith.constant 0 : i32
    %c0_i32_0 = arith.constant 0 : i32
    return %arg0, %c0_i32 : i32, i32
  }
}

module attributes {stable_mosaic.version = 11 : i64} {
  func.func @_bit_glu_matmul_kernel(%arg0: i32, %arg1: i32, %arg2: memref<32x32xbf16, #tpu.memory_space<vmem>>, %arg3: memref<32x1xf32, #tpu.memory_space<vmem>>, %arg4: memref<32x128xbf16, #tpu.memory_space<vmem>>, %arg5: memref<32x64xf32, #tpu.memory_space<vmem>>) attributes {dimension_semantics = [#tpu.dimension_semantics<parallel>, #tpu.dimension_semantics<parallel>], iteration_bounds = array<i64: 1, 1>, scalar_prefetch = 0 : i64, scratch_operands = 0 : i64, tpu.core_type = #tpu.core_type<tc>, window_params = [{transform_indices = @transform_0, window_bounds = array<i64: 32, 32>}, {transform_indices = @transform_1, window_bounds = array<i64: 32, 1>}, {transform_indices = @transform_2, window_bounds = array<i64: 32, 128>}, {transform_indices = @transform_3, window_bounds = array<i64: 32, 64>}]} {
    %c0 = arith.constant 0 : index
    %c0_0 = arith.constant 0 : index
    %0 = vector.load %arg2[%c0, %c0_0] : memref<32x32xbf16, #tpu.memory_space<vmem>>, vector<32x32xbf16>
    %c0_1 = arith.constant 0 : index
    %c0_2 = arith.constant 0 : index
    %1 = vector.load %arg4[%c0_1, %c0_2] : memref<32x128xbf16, #tpu.memory_space<vmem>>, vector<32x128xbf16>
    %cst = arith.constant dense<0.000000e+00> : vector<32x128xf32>
    %2 = tpu.matmul %0, %1, %cst {dimension_numbers = #tpu.dot_dimension_numbers<[1], [0], [0], [1], [0, 0, 1, 1], [], []>} : vector<32x32xbf16>, vector<32x128xbf16>, vector<32x128xf32> -> vector<32x128xf32>
    %c0_3 = arith.constant 0 : index
    %c0_4 = arith.constant 0 : index
    %3 = vector.load %arg3[%c0_3, %c0_4] : memref<32x1xf32, #tpu.memory_space<vmem>>, vector<32x1xf32>
    %4 = vector.broadcast %3 : vector<32x1xf32> to vector<32x128xf32>
    %5 = arith.mulf %2, %4 : vector<32x128xf32>
    %6 = vector.extract_strided_slice %5 {offsets = [0, 0], sizes = [32, 64], strides = [1, 1]} : vector<32x128xf32> to vector<32x64xf32>
    %7 = vector.extract_strided_slice %5 {offsets = [0, 64], sizes = [32, 64], strides = [1, 1]} : vector<32x128xf32> to vector<32x64xf32>
    %cst_5 = arith.constant 0.000000e+00 : f32
    %8 = vector.broadcast %cst_5 : f32 to vector<32x64xf32>
    %9 = arith.subf %8, %7 : vector<32x64xf32>
    %10 = math.exp %9 : vector<32x64xf32>
    %cst_6 = arith.constant 1.000000e+00 : f32
    %11 = vector.broadcast %cst_6 : f32 to vector<32x64xf32>
    %12 = arith.addf %11, %10 : vector<32x64xf32>
    %13 = tpu.reciprocal %12 : vector<32x64xf32> -> vector<32x64xf32>
    %14 = arith.mulf %6, %7 : vector<32x64xf32>
    %15 = arith.mulf %14, %13 : vector<32x64xf32>
    %c0_7 = arith.constant 0 : index
    %c0_8 = arith.constant 0 : index
    %16 = vector.load %arg5[%c0_7, %c0_8] : memref<32x64xf32, #tpu.memory_space<vmem>>, vector<32x64xf32>
    tpu.vector_store %arg5[%c0_7, %c0_8], %15 {strides = array<i32>} : memref<32x64xf32, #tpu.memory_space<vmem>>, vector<32x64xf32>,
    return
  }
  func.func @transform_0(%arg0: i32, %arg1: i32) -> (i32, i32) {
    %c0_i32 = arith.constant 0 : i32
    %c0_i32_0 = arith.constant 0 : i32
    return %arg1, %c0_i32 : i32, i32
  }
  func.func @transform_1(%arg0: i32, %arg1: i32) -> (i32, i32) {
    %c0_i32 = arith.constant 0 : i32
    %c0_i32_0 = arith.constant 0 : i32
    return %arg1, %c0_i32 : i32, i32
  }
  func.func @transform_2(%arg0: i32, %arg1: i32) -> (i32, i32) {
    %c0_i32 = arith.constant 0 : i32
    %c0_i32_0 = arith.constant 0 : i32
    return %c0_i32, %arg0 : i32, i32
  }
  func.func @transform_3(%arg0: i32, %arg1: i32) -> (i32, i32) {
    %c0_i32 = arith.constant 0 : i32
    return %arg1, %arg0 : i32, i32
  }
}

</mosaic_0001>

<llo_original>
// kernel: bit_glu_forward.2
$region0: #{bit_glu_forward.2}
  #allocation0 [shape = 'u32[]', space=smem, size = 0x4, offset = 0x4, fixed_abs, tag = 'smem constant byte address 0x4 - core index']
  #allocation1 [shape = 'u32[144,128]{1,0:T(1,128)}', space=vmem, size = 0x12000, scoped, tag = 'internal scratch']
  %s0 = inlined_call_operand.vmem [shape: f32[32,32], index: 0, kind: input, shape index: {}]
  %s1 = inlined_call_operand.vmem [shape: bf16[32,32], index: 1, kind: output, shape index: {0}]
  %s2 = inlined_call_operand.vmem [shape: f32[32,1], index: 2, kind: output, shape index: {1}]
  %3 = xla_tuple %s1, %s2
  %s4 = sld [smem:[#allocation0]]
  $region22: #{bit_glu_forward.2} parent=0
    _
  %s6 = ssub.s32 1, %s4
  %s7 = scalar_select 0, %s6, %s4
  // Predicated region
  $region2: #{bit_glu_forward.2} parent=0 // pred_check
    _
  $region3: #{bit_glu_forward.2} parent=0 // pred_check_branch
    %9 = sbr.rel (0) target = $region5
  $region4: #{bit_glu_forward.2} parent=0 // pred_region
    _
  $region5: #{bit_glu_forward.2} parent=0 // pred_fallthru
    _
  %v10 = vld [vmem:[%s0] sm:$0xff]
  %v11 = vld [vmem:[%s0 + $0x8] sm:$0xff]
  %v12 = vld [vmem:[%s0 + $0x10] sm:$0xff]
  %v13 = vld [vmem:[%s0 + $0x18] sm:$0xff]
  %v14 = vmul.f32 %v10, %v10
  %v15 = vmul.f32 %v11, %v11
  %v16 = vmul.f32 %v12, %v12
  %v17 = vmul.f32 %v13, %v13
  %vm18 = vcmask 261120
  %v19 = vsel %vm18, %v14, 0.0
  %20 = vadd.xlane.f32.xlu0 %v19
  %v21 = vpop.xlane.xlu0 %20
  %v22 = vsel %vm18, %v15, 0.0
  %23 = vadd.xlane.f32.xlu0 %v22
  %v24 = vpop.xlane.xlu0 %23
  %v25 = vsel %vm18, %v16, 0.0
  %26 = vadd.xlane.f32.xlu0 %v25
  %v27 = vpop.xlane.xlu0 %26
  %v28 = vsel %vm18, %v17, 0.0
  %29 = vadd.xlane.f32.xlu0 %v28
  %v30 = vpop.xlane.xlu0 %29
  %v31 = vmax.f32 %v21, 1e-24
  %v32 = vmax.f32 %v24, 1e-24
  %v33 = vmax.f32 %v27, 1e-24
  %v34 = vmax.f32 %v30, 1e-24
  %v35 = vrsqrt.pop %v31
  %v36 = vrsqrt.pop %v32
  %v37 = vrsqrt.pop %v33
  %v38 = vrsqrt.pop %v34
  %v39 = vmul.f32 %v35, 5.656854
  %v40 = vmul.f32 %v36, 5.656854
  %v41 = vmul.f32 %v37, 5.656854
  %v42 = vmul.f32 %v38, 5.656854
  %v43 = vmul.f32 %v10, %v39
  %v44 = vmul.f32 %v11, %v40
  %v45 = vmul.f32 %v12, %v41
  %v46 = vmul.f32 %v13, %v42
  %v47 = vand.u32 2147483647, %v43
  %v48 = vand.u32 2147483647, %v44
  %v49 = vand.u32 2147483647, %v45
  %v50 = vand.u32 2147483647, %v46
  %v51 = vsel %vm18, %v47, -inf
  %52 = vmax.xlane.f32.xlu0 %v51
  %v53 = vpop.xlane.xlu0 %52
  %v54 = vsel %vm18, %v48, -inf
  %55 = vmax.xlane.f32.xlu0 %v54
  %v56 = vpop.xlane.xlu0 %55
  %v57 = vsel %vm18, %v49, -inf
  %58 = vmax.xlane.f32.xlu0 %v57
  %v59 = vpop.xlane.xlu0 %58
  %v60 = vsel %vm18, %v50, -inf
  %61 = vmax.xlane.f32.xlu0 %v60
  %v62 = vpop.xlane.xlu0 %61
  %v63 = vmax.f32 %v53, 1e-05
  %v64 = vmax.f32 %v56, 1e-05
  %v65 = vmax.f32 %v59, 1e-05
  %v66 = vmax.f32 %v62, 1e-05
  %v67 = vrcp.pop %v63
  %v68 = vrcp.pop %v64
  %v69 = vrcp.pop %v65
  %v70 = vrcp.pop %v66
  %v71 = vmul.f32 %v67, 127.0
  %v72 = vmul.f32 %v68, 127.0
  %v73 = vmul.f32 %v69, 127.0
  %v74 = vmul.f32 %v70, 127.0
  %v75 = vmul.f32 %v43, %v71
  %v76 = vmul.f32 %v44, %v72
  %v77 = vmul.f32 %v45, %v73
  %v78 = vmul.f32 %v46, %v74
  %v79 = vround.ne.pseudo %v75
  %v80 = vround.ne.pseudo %v76
  %v81 = vround.ne.pseudo %v77
  %v82 = vround.ne.pseudo %v78
  %v83 = vmax.f32 %v79, -128.0
  %v84 = vmax.f32 %v80, -128.0
  %v85 = vmax.f32 %v81, -128.0
  %v86 = vmax.f32 %v82, -128.0
  %v87 = vmin.f32 %v83, 127.0
  %v88 = vmin.f32 %v84, 127.0
  %v89 = vmin.f32 %v85, 127.0
  %v90 = vmin.f32 %v86, 127.0
  %v91 = vpack.c.bf16 %v88, %v87
  %v92 = vpack.c.bf16 %v90, %v89
  %v95 = vunpack.c.l.b16 %v91
  %v96 = vunpack.c.h.b16 %v91
  %v97 = vunpack.c.l.b16 %v92
  %v98 = vunpack.c.h.b16 %v92
  %v99 = vpack.c.b16 %v95, %v95
  %v100 = vpack.c.b16 %v96, %v96
  %v101 = vpack.c.b16 %v97, %v97
  %v102 = vpack.c.b16 %v98, %v98
  %vm107 = vcmask 257024
  %108 = vst.msk [vmem:[%s1] sm:$0xf] %vm107, %v99
  %109 = vst.msk [vmem:[%s1 + $0x4] sm:$0xf] %vm107, %v100
  %110 = vst.msk [vmem:[%s1 + $0x8] sm:$0xf] %vm107, %v101
  %111 = vst.msk [vmem:[%s1 + $0xc] sm:$0xf] %vm107, %v102
  %v112 = vmul.f32 %v63, 0.007874016
  %v113 = vmul.f32 %v64, 0.007874016
  %v114 = vmul.f32 %v65, 0.007874016
  %v115 = vmul.f32 %v66, 0.007874016
  %vm116 = vcmask 7168
  %117 = vst.msk [vmem:[%s2] sm:$0xff] %vm116, %v112
  %118 = vst.msk [vmem:[%s2 + $0x8] sm:$0xff] %vm116, %v113
  %119 = vst.msk [vmem:[%s2 + $0x10] sm:$0xff] %vm116, %v114
  %120 = vst.msk [vmem:[%s2 + $0x18] sm:$0xff] %vm116, %v115
  // Predicated region
  $region6: #{bit_glu_forward.2} parent=0 // pred_check
    _
  $region7: #{bit_glu_forward.2} parent=0 // pred_check_branch
    %122 = sbr.rel (0) target = $region9
  $region8: #{bit_glu_forward.2} parent=0 // pred_region
    _
  $region9: #{bit_glu_forward.2} parent=0 // pred_fallthru
    _
  // Predicated region
  $region10: #{bit_glu_forward.2} parent=0 // pred_check
    _
  $region11: #{bit_glu_forward.2} parent=0 // pred_check_branch
    %124 = sbr.rel (0) target = $region13
  $region12: #{bit_glu_forward.2} parent=0 // pred_region
    _
  $region13: #{bit_glu_forward.2} parent=0 // pred_fallthru
    _
  // Predicated region
  $region14: #{bit_glu_forward.2} parent=0 // pred_check
    _
  $region15: #{bit_glu_forward.2} parent=0 // pred_check_branch
    %126 = sbr.rel (0) target = $region17
  $region16: #{bit_glu_forward.2} parent=0 // pred_region
    _
  $region17: #{bit_glu_forward.2} parent=0 // pred_fallthru
    _
  // Predicated region
  $region18: #{bit_glu_forward.2} parent=0 // pred_check
    _
  $region19: #{bit_glu_forward.2} parent=0 // pred_check_branch
    %128 = sbr.rel (0) target = $region21
  $region20: #{bit_glu_forward.2} parent=0 // pred_region
    _
  $region21: #{bit_glu_forward.2} parent=0 // pred_fallthru
    _

// kernel: bit_glu_forward.3
$region0: #{bit_glu_forward.3}
  #allocation0 [shape = 'u32[]', space=smem, size = 0x4, offset = 0x4, fixed_abs, tag = 'smem constant byte address 0x4 - core index']
  #allocation1 [shape = 'u32[144,128]{1,0:T(1,128)}', space=vmem, size = 0x12000, scoped, tag = 'internal scratch']
  %s0 = inlined_call_operand.vmem [shape: bf16[32,32], index: 0, kind: input, shape index: {}]
  %s1 = inlined_call_operand.vmem [shape: f32[32,1], index: 1, kind: input, shape index: {}]
  %s2 = inlined_call_operand.vmem [shape: bf16[32,128], index: 2, kind: input, shape index: {}]
  %s3 = inlined_call_operand.vmem [shape: f32[32,64], index: 3, kind: output, shape index: {}]
  %s4 = sld [smem:[#allocation0]]
  $region22: #{bit_glu_forward.3} parent=0
    _
  %s6 = ssub.s32 1, %s4
  %s7 = scalar_select 0, %s6, %s4
  // Predicated region
  $region2: #{bit_glu_forward.3} parent=0 // pred_check
    _
  $region3: #{bit_glu_forward.3} parent=0 // pred_check_branch
    %9 = sbr.rel (0) target = $region5
  $region4: #{bit_glu_forward.3} parent=0 // pred_region
    _
  $region5: #{bit_glu_forward.3} parent=0 // pred_fallthru
    _
  // Predicated region
  $region6: #{bit_glu_forward.3} parent=0 // pred_check
    _
  $region7: #{bit_glu_forward.3} parent=0 // pred_check_branch
    %11 = sbr.rel (0) target = $region9
  $region8: #{bit_glu_forward.3} parent=0 // pred_region
    _
  $region9: #{bit_glu_forward.3} parent=0 // pred_fallthru
    _
  // Predicated region
  $region10: #{bit_glu_forward.3} parent=0 // pred_check
    _
  $region11: #{bit_glu_forward.3} parent=0 // pred_check_branch
    %13 = sbr.rel (0) target = $region13
  $region12: #{bit_glu_forward.3} parent=0 // pred_region
    _
  $region13: #{bit_glu_forward.3} parent=0 // pred_fallthru
    _
  %v15 = vld [vmem:[%s0] sm:$0xf]
  %v16 = vld [vmem:[%s0 + $0x4] sm:$0xf]
  %v17 = vld [vmem:[%s0 + $0x8] sm:$0xf]
  %v18 = vld [vmem:[%s0 + $0xc] sm:$0xf]
  %v19 = vld [vmem:[%s2] sm:$0xf]
  %v20 = vld [vmem:[%s2 + $0x4] sm:$0xf]
  %v21 = vld [vmem:[%s2 + $0x8] sm:$0xf]
  %v22 = vld [vmem:[%s2 + $0xc] sm:$0xf]
  %v27 = vunpack.c.l.b16 %v15
  %v28 = vunpack.c.l.b16 %v16
  %v29 = vunpack.c.l.b16 %v17
  %v30 = vunpack.c.l.b16 %v18
  %v31 = vpack.c.b16 %v28, %v27
  %v32 = vpack.c.b16 %v30, %v29
  %v37 = vunpack.c.l.b16 %v19
  %v38 = vunpack.c.l.b16 %v20
  %v39 = vunpack.c.l.b16 %v21
  %v40 = vunpack.c.l.b16 %v22
  %v41 = vpack.c.b16 %v38, %v37
  %v42 = vpack.c.b16 %v40, %v39
  %vm45 = vcmask 261120
  %v47 = vsel %vm45, %v31, 0
  %v50 = vsel %vm45, %v32, 0
  %52 = vmatprep.subr.bf16.mxu0 0
  %53 = vmatpush1.bf16.msra.mxu0 0
  %54 = vmatprep.subr.bf16.mxu0 0
  %55 = vmatpush1.bf16.msra.mxu0 0
  %56 = vmatprep.subr.bf16.mxu0 0
  %57 = vmatpush1.bf16.msra.mxu0 0
  %58 = vmatprep.subr.bf16.mxu0 0
  %59 = vmatpush1.bf16.msra.mxu0 0
  %60 = vmatprep.subr.bf16.mxu0 0
  %61 = vmatpush1.bf16.msra.mxu0 0
  %62 = vmatprep.subr.bf16.mxu0 0
  %63 = vmatpush1.bf16.msra.mxu0 0
  %64 = vmatprep.subr.bf16.mxu0 0
  %65 = vmatpush1.bf16.msra.mxu0 %v42
  %66 = vmatprep.subr.bf16.mxu0 0
  %67 = vmatpush1.bf16.msra.mxu0 %v41
  %68 = vmatprep.subr.bf16.mxu0 0
  %69 = vmatpush2.bf16.msra.mxu0 0
  %70 = vmatprep.subr.bf16.mxu0 0
  %71 = vmatpush2.bf16.msra.mxu0 0
  %72 = vmatprep.subr.bf16.mxu0 0
  %73 = vmatpush2.bf16.msra.mxu0 0
  %74 = vmatprep.subr.bf16.mxu0 0
  %75 = vmatpush2.bf16.msra.mxu0 0
  %76 = vmatprep.subr.bf16.mxu0 0
  %77 = vmatpush2.bf16.msra.mxu0 0
  %78 = vmatprep.subr.bf16.mxu0 0
  %79 = vmatpush2.bf16.msra.mxu0 0
  %80 = vmatprep.subr.bf16.mxu0 0
  %81 = vmatpush2.bf16.msra.mxu0 0
  %82 = vmatprep.subr.bf16.mxu0 0
  %83 = vmatpush2.bf16.msra.mxu0 0
  %84 = vmatprep.mubr.bf16.mxu0 0
  %85 = vmatmul.mubr.bf16.gmra.mxu0 %v47
  %v86 = vpop.f32.mrf.mxu0
  %v87 = vadd.f32 0.0, %v86
  %v88 = vpop.f32.mrf.mxu0
  %v89 = vpop.f32.mrf.mxu0
  %v90 = vadd.f32 0.0, %v89
  %v91 = vpop.f32.mrf.mxu0
  %92 = vmatprep.mubr.bf16.mxu0 0
  %93 = vmatmul.mubr.bf16.gmra.mxu0 %v50
  %v94 = vpop.f32.mrf.mxu0
  %v95 = vadd.f32 0.0, %v94
  %v96 = vpop.f32.mrf.mxu0
  %v97 = vpop.f32.mrf.mxu0
  %v98 = vadd.f32 0.0, %v97
  %v99 = vpop.f32.mrf.mxu0
  %100 = vdwg.mxu0
  %v101 = vld [vmem:[%s1] sm:$0xff]
  %v102 = vld [vmem:[%s1 + $0x8] sm:$0xff]
  %v103 = vld [vmem:[%s1 + $0x10] sm:$0xff]
  %v104 = vld [vmem:[%s1 + $0x18] sm:$0xff]
  %106 = vset.pattern.permute.xlu0 0
  %107 = vperm.xlu0 %106, %v101
  %v108 = vpop.permute.xlu0 %107
  %111 = vset.pattern.permute.xlu0 0
  %112 = vperm.xlu0 %111, %v102
  %v113 = vpop.permute.xlu0 %112
  %116 = vset.pattern.permute.xlu0 0
  %117 = vperm.xlu0 %116, %v103
  %v118 = vpop.permute.xlu0 %117
  %121 = vset.pattern.permute.xlu0 0
  %122 = vperm.xlu0 %121, %v104
  %v123 = vpop.permute.xlu0 %122
  %v125 = vmul.f32 %v87, %v108
  %v126 = vmul.f32 %v90, %v113
  %v127 = vmul.f32 %v95, %v118
  %v128 = vmul.f32 %v98, %v123
  %v129 = vsub.f32 0.0, %v125
  %v130 = vsub.f32 0.0, %v126
  %v131 = vsub.f32 0.0, %v127
  %v132 = vsub.f32 0.0, %v128
  %v133 = vmul.f32 %v129, 1.442695
  %v134 = vpow.pop %v133
  %v135 = vmul.f32 %v130, 1.442695
  %v136 = vpow.pop %v135
  %v137 = vmul.f32 %v131, 1.442695
  %v138 = vpow.pop %v137
  %v139 = vmul.f32 %v132, 1.442695
  %v140 = vpow.pop %v139
  %v141 = vadd.f32 %v134, 1.0
  %v142 = vadd.f32 %v136, 1.0
  %v143 = vadd.f32 %v138, 1.0
  %v144 = vadd.f32 %v140, 1.0
  %v145 = vrcp.pop %v141
  %v146 = vrcp.pop %v142
  %v147 = vrcp.pop %v143
  %v148 = vrcp.pop %v144
  %153 = vrot.lane.b32.xlu0 %v125, 64
  %v154 = vpop.permute.xlu0 %153
  %155 = vrot.lane.b32.xlu0 %v126, 64
  %v156 = vpop.permute.xlu0 %155
  %157 = vrot.lane.b32.xlu0 %v127, 64
  %v158 = vpop.permute.xlu0 %157
  %159 = vrot.lane.b32.xlu0 %v128, 64
  %v160 = vpop.permute.xlu0 %159
  %v165 = vmul.f32 %v125, %v154
  %v166 = vmul.f32 %v126, %v156
  %v167 = vmul.f32 %v127, %v158
  %v168 = vmul.f32 %v128, %v160
  %173 = vrot.lane.b32.xlu0 %v145, 64
  %v174 = vpop.permute.xlu0 %173
  %175 = vrot.lane.b32.xlu0 %v146, 64
  %v176 = vpop.permute.xlu0 %175
  %177 = vrot.lane.b32.xlu0 %v147, 64
  %v178 = vpop.permute.xlu0 %177
  %179 = vrot.lane.b32.xlu0 %v148, 64
  %v180 = vpop.permute.xlu0 %179
  %v185 = vmul.f32 %v165, %v174
  %v186 = vmul.f32 %v166, %v176
  %v187 = vmul.f32 %v167, %v178
  %v188 = vmul.f32 %v168, %v180
  %vm189 = vcmask 523264
  %190 = vst.msk [vmem:[%s3] sm:$0xff] %vm189, %v185
  %191 = vst.msk [vmem:[%s3 + $0x8] sm:$0xff] %vm189, %v186
  %192 = vst.msk [vmem:[%s3 + $0x10] sm:$0xff] %vm189, %v187
  %193 = vst.msk [vmem:[%s3 + $0x18] sm:$0xff] %vm189, %v188
  // Predicated region
  $region14: #{bit_glu_forward.3} parent=0 // pred_check
    _
  $region15: #{bit_glu_forward.3} parent=0 // pred_check_branch
    %195 = sbr.rel (0) target = $region17
  $region16: #{bit_glu_forward.3} parent=0 // pred_region
    _
  $region17: #{bit_glu_forward.3} parent=0 // pred_fallthru
    _
  // Predicated region
  $region18: #{bit_glu_forward.3} parent=0 // pred_check
    _
  $region19: #{bit_glu_forward.3} parent=0 // pred_check_branch
    %197 = sbr.rel (0) target = $region21
  $region20: #{bit_glu_forward.3} parent=0 // pred_region
    _
  $region21: #{bit_glu_forward.3} parent=0 // pred_fallthru
    _

// kernel: bit_glu_forward.2
$region0: #{bit_glu_forward.2}
  #allocation0 [shape = 'u32[]', space=smem, size = 0x4, offset = 0x4, fixed_abs, tag = 'smem constant byte address 0x4 - core index']
  #allocation1 [shape = 'u32[144,128]{1,0:T(1,128)}', space=vmem, size = 0x12000, scoped, tag = 'internal scratch']
  %s0 = inlined_call_operand.vmem [shape: f32[32,32], index: 0, kind: input, shape index: {}]
  %s1 = inlined_call_operand.vmem [shape: bf16[32,32], index: 1, kind: output, shape index: {0}]
  %s2 = inlined_call_operand.vmem [shape: f32[32,1], index: 2, kind: output, shape index: {1}]
  %3 = xla_tuple %s1, %s2
  %s4 = sld [smem:[#allocation0]]
  $region22: #{bit_glu_forward.2} parent=0
    _
  %s6 = ssub.s32 1, %s4
  %s7 = scalar_select 0, %s6, %s4
  // Predicated region
  $region2: #{bit_glu_forward.2} parent=0 // pred_check
    _
  $region3: #{bit_glu_forward.2} parent=0 // pred_check_branch
    %9 = sbr.rel (0) target = $region5
  $region4: #{bit_glu_forward.2} parent=0 // pred_region
    _
  $region5: #{bit_glu_forward.2} parent=0 // pred_fallthru
    _
  %v10 = vld [vmem:[%s0] sm:$0xff]
  %v11 = vld [vmem:[%s0 + $0x8] sm:$0xff]
  %v12 = vld [vmem:[%s0 + $0x10] sm:$0xff]
  %v13 = vld [vmem:[%s0 + $0x18] sm:$0xff]
  %v14 = vmul.f32 %v10, %v10
  %v15 = vmul.f32 %v11, %v11
  %v16 = vmul.f32 %v12, %v12
  %v17 = vmul.f32 %v13, %v13
  %vm18 = vcmask 261120
  %v19 = vsel %vm18, %v14, 0.0
  %20 = vadd.xlane.f32.xlu0 %v19
  %v21 = vpop.xlane.xlu0 %20
  %v22 = vsel %vm18, %v15, 0.0
  %23 = vadd.xlane.f32.xlu0 %v22
  %v24 = vpop.xlane.xlu0 %23
  %v25 = vsel %vm18, %v16, 0.0
  %26 = vadd.xlane.f32.xlu0 %v25
  %v27 = vpop.xlane.xlu0 %26
  %v28 = vsel %vm18, %v17, 0.0
  %29 = vadd.xlane.f32.xlu0 %v28
  %v30 = vpop.xlane.xlu0 %29
  %v31 = vmax.f32 %v21, 1e-24
  %v32 = vmax.f32 %v24, 1e-24
  %v33 = vmax.f32 %v27, 1e-24
  %v34 = vmax.f32 %v30, 1e-24
  %v35 = vrsqrt.pop %v31
  %v36 = vrsqrt.pop %v32
  %v37 = vrsqrt.pop %v33
  %v38 = vrsqrt.pop %v34
  %v39 = vmul.f32 %v35, 5.656854
  %v40 = vmul.f32 %v36, 5.656854
  %v41 = vmul.f32 %v37, 5.656854
  %v42 = vmul.f32 %v38, 5.656854
  %v43 = vmul.f32 %v10, %v39
  %v44 = vmul.f32 %v11, %v40
  %v45 = vmul.f32 %v12, %v41
  %v46 = vmul.f32 %v13, %v42
  %v47 = vand.u32 2147483647, %v43
  %v48 = vand.u32 2147483647, %v44
  %v49 = vand.u32 2147483647, %v45
  %v50 = vand.u32 2147483647, %v46
  %v51 = vsel %vm18, %v47, -inf
  %52 = vmax.xlane.f32.xlu0 %v51
  %v53 = vpop.xlane.xlu0 %52
  %v54 = vsel %vm18, %v48, -inf
  %55 = vmax.xlane.f32.xlu0 %v54
  %v56 = vpop.xlane.xlu0 %55
  %v57 = vsel %vm18, %v49, -inf
  %58 = vmax.xlane.f32.xlu0 %v57
  %v59 = vpop.xlane.xlu0 %58
  %v60 = vsel %vm18, %v50, -inf
  %61 = vmax.xlane.f32.xlu0 %v60
  %v62 = vpop.xlane.xlu0 %61
  %v63 = vmax.f32 %v53, 1e-05
  %v64 = vmax.f32 %v56, 1e-05
  %v65 = vmax.f32 %v59, 1e-05
  %v66 = vmax.f32 %v62, 1e-05
  %v67 = vrcp.pop %v63
  %v68 = vrcp.pop %v64
  %v69 = vrcp.pop %v65
  %v70 = vrcp.pop %v66
  %v71 = vmul.f32 %v67, 127.0
  %v72 = vmul.f32 %v68, 127.0
  %v73 = vmul.f32 %v69, 127.0
  %v74 = vmul.f32 %v70, 127.0
  %v75 = vmul.f32 %v43, %v71
  %v76 = vmul.f32 %v44, %v72
  %v77 = vmul.f32 %v45, %v73
  %v78 = vmul.f32 %v46, %v74
  %v79 = vround.ne.pseudo %v75
  %v80 = vround.ne.pseudo %v76
  %v81 = vround.ne.pseudo %v77
  %v82 = vround.ne.pseudo %v78
  %v83 = vmax.f32 %v79, -128.0
  %v84 = vmax.f32 %v80, -128.0
  %v85 = vmax.f32 %v81, -128.0
  %v86 = vmax.f32 %v82, -128.0
  %v87 = vmin.f32 %v83, 127.0
  %v88 = vmin.f32 %v84, 127.0
  %v89 = vmin.f32 %v85, 127.0
  %v90 = vmin.f32 %v86, 127.0
  %v91 = vpack.c.bf16 %v88, %v87
  %v92 = vpack.c.bf16 %v90, %v89
  %v95 = vunpack.c.l.b16 %v91
  %v96 = vunpack.c.h.b16 %v91
  %v97 = vunpack.c.l.b16 %v92
  %v98 = vunpack.c.h.b16 %v92
  %v99 = vpack.c.b16 %v95, %v95
  %v100 = vpack.c.b16 %v96, %v96
  %v101 = vpack.c.b16 %v97, %v97
  %v102 = vpack.c.b16 %v98, %v98
  %vm107 = vcmask 257024
  %108 = vst.msk [vmem:[%s1] sm:$0xf] %vm107, %v99
  %109 = vst.msk [vmem:[%s1 + $0x4] sm:$0xf] %vm107, %v100
  %110 = vst.msk [vmem:[%s1 + $0x8] sm:$0xf] %vm107, %v101
  %111 = vst.msk [vmem:[%s1 + $0xc] sm:$0xf] %vm107, %v102
  %v112 = vmul.f32 %v63, 0.007874016
  %v113 = vmul.f32 %v64, 0.007874016
  %v114 = vmul.f32 %v65, 0.007874016
  %v115 = vmul.f32 %v66, 0.007874016
  %vm116 = vcmask 7168
  %117 = vst.msk [vmem:[%s2] sm:$0xff] %vm116, %v112
  %118 = vst.msk [vmem:[%s2 + $0x8] sm:$0xff] %vm116, %v113
  %119 = vst.msk [vmem:[%s2 + $0x10] sm:$0xff] %vm116, %v114
  %120 = vst.msk [vmem:[%s2 + $0x18] sm:$0xff] %vm116, %v115
  // Predicated region
  $region6: #{bit_glu_forward.2} parent=0 // pred_check
    _
  $region7: #{bit_glu_forward.2} parent=0 // pred_check_branch
    %122 = sbr.rel (0) target = $region9
  $region8: #{bit_glu_forward.2} parent=0 // pred_region
    _
  $region9: #{bit_glu_forward.2} parent=0 // pred_fallthru
    _
  // Predicated region
  $region10: #{bit_glu_forward.2} parent=0 // pred_check
    _
  $region11: #{bit_glu_forward.2} parent=0 // pred_check_branch
    %124 = sbr.rel (0) target = $region13
  $region12: #{bit_glu_forward.2} parent=0 // pred_region
    _
  $region13: #{bit_glu_forward.2} parent=0 // pred_fallthru
    _
  // Predicated region
  $region14: #{bit_glu_forward.2} parent=0 // pred_check
    _
  $region15: #{bit_glu_forward.2} parent=0 // pred_check_branch
    %126 = sbr.rel (0) target = $region17
  $region16: #{bit_glu_forward.2} parent=0 // pred_region
    _
  $region17: #{bit_glu_forward.2} parent=0 // pred_fallthru
    _
  // Predicated region
  $region18: #{bit_glu_forward.2} parent=0 // pred_check
    _
  $region19: #{bit_glu_forward.2} parent=0 // pred_check_branch
    %128 = sbr.rel (0) target = $region21
  $region20: #{bit_glu_forward.2} parent=0 // pred_region
    _
  $region21: #{bit_glu_forward.2} parent=0 // pred_fallthru
    _

// kernel: bit_glu_forward.3
$region0: #{bit_glu_forward.3}
  #allocation0 [shape = 'u32[]', space=smem, size = 0x4, offset = 0x4, fixed_abs, tag = 'smem constant byte address 0x4 - core index']
  #allocation1 [shape = 'u32[144,128]{1,0:T(1,128)}', space=vmem, size = 0x12000, scoped, tag = 'internal scratch']
  %s0 = inlined_call_operand.vmem [shape: bf16[32,32], index: 0, kind: input, shape index: {}]
  %s1 = inlined_call_operand.vmem [shape: f32[32,1], index: 1, kind: input, shape index: {}]
  %s2 = inlined_call_operand.vmem [shape: bf16[32,128], index: 2, kind: input, shape index: {}]
  %s3 = inlined_call_operand.vmem [shape: f32[32,64], index: 3, kind: output, shape index: {}]
  %s4 = sld [smem:[#allocation0]]
  $region22: #{bit_glu_forward.3} parent=0
    _
  %s6 = ssub.s32 1, %s4
  %s7 = scalar_select 0, %s6, %s4
  // Predicated region
  $region2: #{bit_glu_forward.3} parent=0 // pred_check
    _
  $region3: #{bit_glu_forward.3} parent=0 // pred_check_branch
    %9 = sbr.rel (0) target = $region5
  $region4: #{bit_glu_forward.3} parent=0 // pred_region
    _
  $region5: #{bit_glu_forward.3} parent=0 // pred_fallthru
    _
  // Predicated region
  $region6: #{bit_glu_forward.3} parent=0 // pred_check
    _
  $region7: #{bit_glu_forward.3} parent=0 // pred_check_branch
    %11 = sbr.rel (0) target = $region9
  $region8: #{bit_glu_forward.3} parent=0 // pred_region
    _
  $region9: #{bit_glu_forward.3} parent=0 // pred_fallthru
    _
  // Predicated region
  $region10: #{bit_glu_forward.3} parent=0 // pred_check
    _
  $region11: #{bit_glu_forward.3} parent=0 // pred_check_branch
    %13 = sbr.rel (0) target = $region13
  $region12: #{bit_glu_forward.3} parent=0 // pred_region
    _
  $region13: #{bit_glu_forward.3} parent=0 // pred_fallthru
    _
  %v15 = vld [vmem:[%s0] sm:$0xf]
  %v16 = vld [vmem:[%s0 + $0x4] sm:$0xf]
  %v17 = vld [vmem:[%s0 + $0x8] sm:$0xf]
  %v18 = vld [vmem:[%s0 + $0xc] sm:$0xf]
  %v19 = vld [vmem:[%s2] sm:$0xf]
  %v20 = vld [vmem:[%s2 + $0x4] sm:$0xf]
  %v21 = vld [vmem:[%s2 + $0x8] sm:$0xf]
  %v22 = vld [vmem:[%s2 + $0xc] sm:$0xf]
  %v27 = vunpack.c.l.b16 %v15
  %v28 = vunpack.c.l.b16 %v16
  %v29 = vunpack.c.l.b16 %v17
  %v30 = vunpack.c.l.b16 %v18
  %v31 = vpack.c.b16 %v28, %v27
  %v32 = vpack.c.b16 %v30, %v29
  %v37 = vunpack.c.l.b16 %v19
  %v38 = vunpack.c.l.b16 %v20
  %v39 = vunpack.c.l.b16 %v21
  %v40 = vunpack.c.l.b16 %v22
  %v41 = vpack.c.b16 %v38, %v37
  %v42 = vpack.c.b16 %v40, %v39
  %vm45 = vcmask 261120
  %v47 = vsel %vm45, %v31, 0
  %v50 = vsel %vm45, %v32, 0
  %52 = vmatprep.subr.bf16.mxu0 0
  %53 = vmatpush1.bf16.msra.mxu0 0
  %54 = vmatprep.subr.bf16.mxu0 0
  %55 = vmatpush1.bf16.msra.mxu0 0
  %56 = vmatprep.subr.bf16.mxu0 0
  %57 = vmatpush1.bf16.msra.mxu0 0
  %58 = vmatprep.subr.bf16.mxu0 0
  %59 = vmatpush1.bf16.msra.mxu0 0
  %60 = vmatprep.subr.bf16.mxu0 0
  %61 = vmatpush1.bf16.msra.mxu0 0
  %62 = vmatprep.subr.bf16.mxu0 0
  %63 = vmatpush1.bf16.msra.mxu0 0
  %64 = vmatprep.subr.bf16.mxu0 0
  %65 = vmatpush1.bf16.msra.mxu0 %v42
  %66 = vmatprep.subr.bf16.mxu0 0
  %67 = vmatpush1.bf16.msra.mxu0 %v41
  %68 = vmatprep.subr.bf16.mxu0 0
  %69 = vmatpush2.bf16.msra.mxu0 0
  %70 = vmatprep.subr.bf16.mxu0 0
  %71 = vmatpush2.bf16.msra.mxu0 0
  %72 = vmatprep.subr.bf16.mxu0 0
  %73 = vmatpush2.bf16.msra.mxu0 0
  %74 = vmatprep.subr.bf16.mxu0 0
  %75 = vmatpush2.bf16.msra.mxu0 0
  %76 = vmatprep.subr.bf16.mxu0 0
  %77 = vmatpush2.bf16.msra.mxu0 0
  %78 = vmatprep.subr.bf16.mxu0 0
  %79 = vmatpush2.bf16.msra.mxu0 0
  %80 = vmatprep.subr.bf16.mxu0 0
  %81 = vmatpush2.bf16.msra.mxu0 0
  %82 = vmatprep.subr.bf16.mxu0 0
  %83 = vmatpush2.bf16.msra.mxu0 0
  %84 = vmatprep.mubr.bf16.mxu0 0
  %85 = vmatmul.mubr.bf16.gmra.mxu0 %v47
  %v86 = vpop.f32.mrf.mxu0
  %v87 = vadd.f32 0.0, %v86
  %v88 = vpop.f32.mrf.mxu0
  %v89 = vpop.f32.mrf.mxu0
  %v90 = vadd.f32 0.0, %v89
  %v91 = vpop.f32.mrf.mxu0
  %92 = vmatprep.mubr.bf16.mxu0 0
  %93 = vmatmul.mubr.bf16.gmra.mxu0 %v50
  %v94 = vpop.f32.mrf.mxu0
  %v95 = vadd.f32 0.0, %v94
  %v96 = vpop.f32.mrf.mxu0
  %v97 = vpop.f32.mrf.mxu0
  %v98 = vadd.f32 0.0, %v97
  %v99 = vpop.f32.mrf.mxu0
  %100 = vdwg.mxu0
  %v101 = vld [vmem:[%s1] sm:$0xff]
  %v102 = vld [vmem:[%s1 + $0x8] sm:$0xff]
  %v103 = vld [vmem:[%s1 + $0x10] sm:$0xff]
  %v104 = vld [vmem:[%s1 + $0x18] sm:$0xff]
  %106 = vset.pattern.permute.xlu0 0
  %107 = vperm.xlu0 %106, %v101
  %v108 = vpop.permute.xlu0 %107
  %111 = vset.pattern.permute.xlu0 0
  %112 = vperm.xlu0 %111, %v102
  %v113 = vpop.permute.xlu0 %112
  %116 = vset.pattern.permute.xlu0 0
  %117 = vperm.xlu0 %116, %v103
  %v118 = vpop.permute.xlu0 %117
  %121 = vset.pattern.permute.xlu0 0
  %122 = vperm.xlu0 %121, %v104
  %v123 = vpop.permute.xlu0 %122
  %v125 = vmul.f32 %v87, %v108
  %v126 = vmul.f32 %v90, %v113
  %v127 = vmul.f32 %v95, %v118
  %v128 = vmul.f32 %v98, %v123
  %v129 = vsub.f32 0.0, %v125
  %v130 = vsub.f32 0.0, %v126
  %v131 = vsub.f32 0.0, %v127
  %v132 = vsub.f32 0.0, %v128
  %v133 = vmul.f32 %v129, 1.442695
  %v134 = vpow.pop %v133
  %v135 = vmul.f32 %v130, 1.442695
  %v136 = vpow.pop %v135
  %v137 = vmul.f32 %v131, 1.442695
  %v138 = vpow.pop %v137
  %v139 = vmul.f32 %v132, 1.442695
  %v140 = vpow.pop %v139
  %v141 = vadd.f32 %v134, 1.0
  %v142 = vadd.f32 %v136, 1.0
  %v143 = vadd.f32 %v138, 1.0
  %v144 = vadd.f32 %v140, 1.0
  %v145 = vrcp.pop %v141
  %v146 = vrcp.pop %v142
  %v147 = vrcp.pop %v143
  %v148 = vrcp.pop %v144
  %153 = vrot.lane.b32.xlu0 %v125, 64
  %v154 = vpop.permute.xlu0 %153
  %155 = vrot.lane.b32.xlu0 %v126, 64
  %v156 = vpop.permute.xlu0 %155
  %157 = vrot.lane.b32.xlu0 %v127, 64
  %v158 = vpop.permute.xlu0 %157
  %159 = vrot.lane.b32.xlu0 %v128, 64
  %v160 = vpop.permute.xlu0 %159
  %v165 = vmul.f32 %v125, %v154
  %v166 = vmul.f32 %v126, %v156
  %v167 = vmul.f32 %v127, %v158
  %v168 = vmul.f32 %v128, %v160
  %173 = vrot.lane.b32.xlu0 %v145, 64
  %v174 = vpop.permute.xlu0 %173
  %175 = vrot.lane.b32.xlu0 %v146, 64
  %v176 = vpop.permute.xlu0 %175
  %177 = vrot.lane.b32.xlu0 %v147, 64
  %v178 = vpop.permute.xlu0 %177
  %179 = vrot.lane.b32.xlu0 %v148, 64
  %v180 = vpop.permute.xlu0 %179
  %v185 = vmul.f32 %v165, %v174
  %v186 = vmul.f32 %v166, %v176
  %v187 = vmul.f32 %v167, %v178
  %v188 = vmul.f32 %v168, %v180
  %vm189 = vcmask 523264
  %190 = vst.msk [vmem:[%s3] sm:$0xff] %vm189, %v185
  %191 = vst.msk [vmem:[%s3 + $0x8] sm:$0xff] %vm189, %v186
  %192 = vst.msk [vmem:[%s3 + $0x10] sm:$0xff] %vm189, %v187
  %193 = vst.msk [vmem:[%s3 + $0x18] sm:$0xff] %vm189, %v188
  // Predicated region
  $region14: #{bit_glu_forward.3} parent=0 // pred_check
    _
  $region15: #{bit_glu_forward.3} parent=0 // pred_check_branch
    %195 = sbr.rel (0) target = $region17
  $region16: #{bit_glu_forward.3} parent=0 // pred_region
    _
  $region17: #{bit_glu_forward.3} parent=0 // pred_fallthru
    _
  // Predicated region
  $region18: #{bit_glu_forward.3} parent=0 // pred_check
    _
  $region19: #{bit_glu_forward.3} parent=0 // pred_check_branch
    %197 = sbr.rel (0) target = $region21
  $region20: #{bit_glu_forward.3} parent=0 // pred_region
    _
  $region21: #{bit_glu_forward.3} parent=0 // pred_fallthru
    _

</llo_original>
